<compile_context>
chip_gen: v6e
topology: v6e:2x2x1
jax: 0.10.0
libtpu: 0.0.40
codegen_flags: <defaults>
</compile_context>

<pallas_src>
import functools

import jax
import jax.numpy as jnp
from jax.experimental import pallas as pl
from jax.experimental.pallas import tpu as pltpu

F_IN, H1, H2, F_OUT = 4, 8, 8, 1
F_PAD = 8                 # feature rows padded to one full sublane group
DEFAULT_TILE = 65536      # samples (lanes) per grid step


def _mlp_kernel(x_ref, w1_ref, b1_ref, w2_ref, b2_ref, w3_ref, b3_ref, o_ref):
    # x_ref : (8, TILE) feature-major tile (rows 0..3 = features, rows 4..7 = 0)
    # w*_ref: (8, 8) zero-padded weights, b*_ref: (out, 1) biases (VMEM resident)
    # o_ref : (1, TILE) lane-dense output tile
    hp = jax.lax.Precision.HIGHEST        # keep true-f32 accuracy on the MXU
    x = x_ref[...]                                                   # (8, TILE)

    # Layer 1: 4 -> 8 (padded to 8 -> 8), ReLU.
    h1 = jnp.dot(w1_ref[...], x, preferred_element_type=jnp.float32,
                 precision=hp)
    h1 = jnp.maximum(h1 + b1_ref[...], 0.0)                          # (8, TILE)

    # Layer 2: 8 -> 8, ReLU.
    h2 = jnp.dot(w2_ref[...], h1, preferred_element_type=jnp.float32,
                 precision=hp)
    h2 = jnp.maximum(h2 + b2_ref[...], 0.0)                          # (8, TILE)

    # Layer 3: 8 -> 1 (W3 zero-padded to (8,8); only row 0 is meaningful).
    y = jnp.dot(w3_ref[...], h2, preferred_element_type=jnp.float32,
                precision=hp)                                        # (8, TILE)
    o_ref[...] = y[0:1, :] + b3_ref[...]                             # (1, TILE)


def _round_up(x, m):
    return (x + m - 1) // m * m


def _forward_feature_major(xt, params, tile):
    """xt: (8, n_pad) feature-major f32 (rows >= F_IN must be zero)."""
    w1, b1, w2, b2, w3, b3 = params
    n_pad = xt.shape[1]

    # MXU/sublane-friendly parameter tiles (tiny, resident in VMEM).
    w1p = jnp.pad(w1.astype(jnp.float32), ((0, 0), (0, F_PAD - F_IN)))   # (8,8)
    w2p = w2.astype(jnp.float32)                                         # (8,8)
    w3p = jnp.pad(w3.astype(jnp.float32), ((0, F_PAD - F_OUT), (0, 0)))  # (8,8)
    b1c = b1.astype(jnp.float32).reshape(H1, 1)
    b2c = b2.astype(jnp.float32).reshape(H2, 1)
    b3c = b3.astype(jnp.float32).reshape(F_OUT, 1)

    vmem = pl.BlockSpec(memory_space=pltpu.MemorySpace.VMEM)  # whole array, resident
    return pl.pallas_call(
        _mlp_kernel,
        out_shape=jax.ShapeDtypeStruct((1, n_pad), jnp.float32),
        grid=(pl.cdiv(n_pad, tile),),
        in_specs=[
            pl.BlockSpec((F_PAD, tile), lambda i: (0, i)),   # x^T tile (VMEM)
            vmem, vmem, vmem, vmem, vmem, vmem,              # params (resident)
        ],
        out_specs=pl.BlockSpec((1, tile), lambda i: (0, i)),  # lane-dense out
        compiler_params=pltpu.CompilerParams(
            dimension_semantics=("parallel",),
            vmem_limit_bytes=32 * 1024 * 1024,
        ),
    )(xt, w1p, b1c, w2p, b2c, w3p, b3c)


@functools.partial(jax.jit, static_argnames=("tile_n",))
def predict_crowdfund_v2(x, params, tile_n=DEFAULT_TILE):
    """x: [N, 4] float32 (torch layout).  Returns [N, 1] float32."""
    n = x.shape[0]
    n_pad = _round_up(n, 128)                   # lane alignment only; grid is cdiv
    tile = _round_up(min(tile_n, n_pad), 128)

    # Single fused pad+transpose copy: (N, 4) -> (8, n_pad), zero feature rows
    # 4..7 and zero batch columns n..n_pad-1.
    xt = jnp.pad(x.astype(jnp.float32), ((0, n_pad - n), (0, F_PAD - F_IN))).T

    out = _forward_feature_major(xt, params, tile)
    # (1, n_pad) -> drop padded lanes -> (N, 1).
    return out[0, :n].reshape(n, 1)


def init_params(key):
    """Torch-style nn.Linear init: W [out, in], b [out], U(-1/sqrt(fan_in), +...)."""
    def linear(key, fan_in, fan_out):
        kw, kb = jax.random.split(key)
        bound = 1.0 / jnp.sqrt(jnp.float32(fan_in))
        w = jax.random.uniform(kw, (fan_out, fan_in), jnp.float32, -bound, bound)
        b = jax.random.uniform(kb, (fan_out,), jnp.float32, -bound, bound)
        return w, b

    k1, k2, k3 = jax.random.split(key, 3)
    w1, b1 = linear(k1, F_IN, H1)
    w2, b2 = linear(k2, H1, H2)
    w3, b3 = linear(k3, H2, F_OUT)
    return w1, b1, w2, b2, w3, b3


def _reference(x, params):
    w1, b1, w2, b2, w3, b3 = params
    hp = jax.lax.Precision.HIGHEST
    h = jnp.maximum(jnp.dot(x, w1.T, precision=hp) + b1, 0.0)
    h = jnp.maximum(jnp.dot(h, w2.T, precision=hp) + b2, 0.0)
    return jnp.dot(h, w3.T, precision=hp) + b3


if __name__ == "__main__":
    key = jax.random.PRNGKey(0)
    k_params, k_x1, k_x2 = jax.random.split(key, 3)
    params = init_params(k_params)

    # Small batch consistent with nn.Linear(4, 8): 8 samples x 4 features.
    x_small = jax.random.normal(k_x1, (8, 4), dtype=jnp.float32)
    out_small = jax.block_until_ready(predict_crowdfund_v2(x_small, params))
    ref_small = _reference(x_small, params)
    assert out_small.shape == (8, 1), out_small.shape
    assert jnp.allclose(out_small, ref_small, atol=5e-5, rtol=5e-5)

    # Ragged batch exercising a multi-step cdiv grid + a partial last block.
    x_big = jax.random.normal(k_x2, (300, 4), dtype=jnp.float32)
    out_big = jax.block_until_ready(
        predict_crowdfund_v2(x_big, params, tile_n=256))
    ref_big = _reference(x_big, params)
    assert out_big.shape == (300, 1), out_big.shape
    assert jnp.allclose(out_big, ref_big, atol=5e-5, rtol=5e-5)

    print("KERNEL_OK")
</pallas_src>

<mosaic_0001>
module attributes {stable_mosaic.version = 11 : i64} {
  func.func @_mlp_kernel(%arg0: i32, %arg1: memref<8x128xf32, #tpu.memory_space<vmem>>, %arg2: memref<8x8xf32, #tpu.memory_space<vmem>>, %arg3: memref<8x1xf32, #tpu.memory_space<vmem>>, %arg4: memref<8x8xf32, #tpu.memory_space<vmem>>, %arg5: memref<8x1xf32, #tpu.memory_space<vmem>>, %arg6: memref<8x8xf32, #tpu.memory_space<vmem>>, %arg7: memref<1x1xf32, #tpu.memory_space<vmem>>, %arg8: memref<1x128xf32, #tpu.memory_space<vmem>>) attributes {dimension_semantics = [#tpu.dimension_semantics<parallel>], iteration_bounds = array<i64: 1>, scalar_prefetch = 0 : i64, scratch_operands = 0 : i64, tpu.core_type = #tpu.core_type<tc>, window_params = [{transform_indices = @transform_0, window_bounds = array<i64: 8, 128>}, {pipeline_mode = #tpu.pipeline_mode<synchronous>, transform_indices = @transform_1, window_bounds = array<i64: 8, 8>}, {pipeline_mode = #tpu.pipeline_mode<synchronous>, transform_indices = @transform_2, window_bounds = array<i64: 8, 1>}, {pipeline_mode = #tpu.pipeline_mode<synchronous>, transform_indices = @transform_3, window_bounds = array<i64: 8, 8>}, {pipeline_mode = #tpu.pipeline_mode<synchronous>, transform_indices = @transform_4, window_bounds = array<i64: 8, 1>}, {pipeline_mode = #tpu.pipeline_mode<synchronous>, transform_indices = @transform_5, window_bounds = array<i64: 8, 8>}, {pipeline_mode = #tpu.pipeline_mode<synchronous>, transform_indices = @transform_6, window_bounds = array<i64: 1, 1>}, {transform_indices = @transform_7, window_bounds = array<i64: 1, 128>}]} {
    %c0 = arith.constant 0 : index
    %c0_0 = arith.constant 0 : index
    %0 = vector.load %arg1[%c0, %c0_0] : memref<8x128xf32, #tpu.memory_space<vmem>>, vector<8x128xf32>
    %c0_1 = arith.constant 0 : index
    %c0_2 = arith.constant 0 : index
    %1 = vector.load %arg2[%c0_1, %c0_2] : memref<8x8xf32, #tpu.memory_space<vmem>>, vector<8x8xf32>
    %cst = arith.constant dense<0.000000e+00> : vector<8x128xf32>
    %2 = tpu.matmul %1, %0, %cst {dimension_numbers = #tpu.dot_dimension_numbers<[1], [0], [0], [1], [0, 0, 1, 1], [], []>, precision = #tpu.contract_precision<fp32>} : vector<8x8xf32>, vector<8x128xf32>, vector<8x128xf32> -> vector<8x128xf32>
    %c0_3 = arith.constant 0 : index
    %c0_4 = arith.constant 0 : index
    %3 = vector.load %arg3[%c0_3, %c0_4] : memref<8x1xf32, #tpu.memory_space<vmem>>, vector<8x1xf32>
    %4 = vector.broadcast %3 : vector<8x1xf32> to vector<8x128xf32>
    %5 = arith.addf %2, %4 : vector<8x128xf32>
    %cst_5 = arith.constant 0.000000e+00 : f32
    %6 = vector.broadcast %cst_5 : f32 to vector<8x128xf32>
    %7 = arith.maximumf %5, %6 : vector<8x128xf32>
    %c0_6 = arith.constant 0 : index
    %c0_7 = arith.constant 0 : index
    %8 = vector.load %arg4[%c0_6, %c0_7] : memref<8x8xf32, #tpu.memory_space<vmem>>, vector<8x8xf32>
    %cst_8 = arith.constant dense<0.000000e+00> : vector<8x128xf32>
    %9 = tpu.matmul %8, %7, %cst_8 {dimension_numbers = #tpu.dot_dimension_numbers<[1], [0], [0], [1], [0, 0, 1, 1], [], []>, precision = #tpu.contract_precision<fp32>} : vector<8x8xf32>, vector<8x128xf32>, vector<8x128xf32> -> vector<8x128xf32>
    %c0_9 = arith.constant 0 : index
    %c0_10 = arith.constant 0 : index
    %10 = vector.load %arg5[%c0_9, %c0_10] : memref<8x1xf32, #tpu.memory_space<vmem>>, vector<8x1xf32>
    %11 = vector.broadcast %10 : vector<8x1xf32> to vector<8x128xf32>
    %12 = arith.addf %9, %11 : vector<8x128xf32>
    %cst_11 = arith.constant 0.000000e+00 : f32
    %13 = vector.broadcast %cst_11 : f32 to vector<8x128xf32>
    %14 = arith.maximumf %12, %13 : vector<8x128xf32>
    %c0_12 = arith.constant 0 : index
    %c0_13 = arith.constant 0 : index
    %15 = vector.load %arg6[%c0_12, %c0_13] : memref<8x8xf32, #tpu.memory_space<vmem>>, vector<8x8xf32>
    %cst_14 = arith.constant dense<0.000000e+00> : vector<8x128xf32>
    %16 = tpu.matmul %15, %14, %cst_14 {dimension_numbers = #tpu.dot_dimension_numbers<[1], [0], [0], [1], [0, 0, 1, 1], [], []>, precision = #tpu.contract_precision<fp32>} : vector<8x8xf32>, vector<8x128xf32>, vector<8x128xf32> -> vector<8x128xf32>
    %17 = vector.extract_strided_slice %16 {offsets = [0, 0], sizes = [1, 128], strides = [1, 1]} : vector<8x128xf32> to vector<1x128xf32>
    %c0_15 = arith.constant 0 : index
    %c0_16 = arith.constant 0 : index
    %18 = vector.load %arg7[%c0_15, %c0_16] : memref<1x1xf32, #tpu.memory_space<vmem>>, vector<1x1xf32>
    %19 = vector.broadcast %18 : vector<1x1xf32> to vector<1x128xf32>
    %20 = arith.addf %17, %19 : vector<1x128xf32>
    %c0_17 = arith.constant 0 : index
    %c0_18 = arith.constant 0 : index
    %21 = vector.load %arg8[%c0_17, %c0_18] : memref<1x128xf32, #tpu.memory_space<vmem>>, vector<1x128xf32>
    tpu.vector_store %arg8[%c0_17, %c0_18], %20 {strides = array<i32>} : memref<1x128xf32, #tpu.memory_space<vmem>>, vector<1x128xf32>,
    return
  }
  func.func @transform_0(%arg0: i32) -> (i32, i32) {
    %c0_i32 = arith.constant 0 : i32
    %c0_i32_0 = arith.constant 0 : i32
    return %c0_i32, %arg0 : i32, i32
  }
  func.func @transform_1(%arg0: i32) -> (i32, i32) {
    %c0_i32 = arith.constant 0 : i32
    %c0_i32_0 = arith.constant 0 : i32
    %c0_i32_1 = arith.constant 0 : i32
    return %c0_i32, %c0_i32_0 : i32, i32
  }
  func.func @transform_2(%arg0: i32) -> (i32, i32) {
    %c0_i32 = arith.constant 0 : i32
    %c0_i32_0 = arith.constant 0 : i32
    %c0_i32_1 = arith.constant 0 : i32
    return %c0_i32, %c0_i32_0 : i32, i32
  }
  func.func @transform_3(%arg0: i32) -> (i32, i32) {
    %c0_i32 = arith.constant 0 : i32
    %c0_i32_0 = arith.constant 0 : i32
    %c0_i32_1 = arith.constant 0 : i32
    return %c0_i32, %c0_i32_0 : i32, i32
  }
  func.func @transform_4(%arg0: i32) -> (i32, i32) {
    %c0_i32 = arith.constant 0 : i32
    %c0_i32_0 = arith.constant 0 : i32
    %c0_i32_1 = arith.constant 0 : i32
    return %c0_i32, %c0_i32_0 : i32, i32
  }
  func.func @transform_5(%arg0: i32) -> (i32, i32) {
    %c0_i32 = arith.constant 0 : i32
    %c0_i32_0 = arith.constant 0 : i32
    %c0_i32_1 = arith.constant 0 : i32
    return %c0_i32, %c0_i32_0 : i32, i32
  }
  func.func @transform_6(%arg0: i32) -> (i32, i32) {
    %c0_i32 = arith.constant 0 : i32
    %c0_i32_0 = arith.constant 0 : i32
    %c0_i32_1 = arith.constant 0 : i32
    return %c0_i32, %c0_i32_0 : i32, i32
  }
  func.func @transform_7(%arg0: i32) -> (i32, i32) {
    %c0_i32 = arith.constant 0 : i32
    %c0_i32_0 = arith.constant 0 : i32
    return %c0_i32, %arg0 : i32, i32
  }
}

</mosaic_0001>

<llo_original>
// kernel: predict_crowdfund_v2.1
$region0: #{predict_crowdfund_v2.1}
  #allocation0 [shape = 'u32[]', space=smem, size = 0x4, offset = 0x4, fixed_abs, tag = 'smem constant byte address 0x4 - core index']
  #allocation1 [shape = 'u32[144,128]{1,0:T(1,128)}', space=vmem, size = 0x12000, scoped, tag = 'internal scratch']
  #allocation2 [shape = 'f32[1,1]{1,0:T(1,128)S(1)}', space=vmem, size = 0x200, scoped, tag = 'scoped memory for predict_crowdfund_v2.1']
  %s0 = inlined_call_operand.vmem [shape: f32[8,128], index: 0, kind: input, shape index: {}]
  %s1 = inlined_call_operand.vmem [shape: f32[8,8], index: 1, kind: input, shape index: {}]
  %s2 = inlined_call_operand.vmem [shape: f32[8,1], index: 2, kind: input, shape index: {}]
  %s3 = inlined_call_operand.vmem [shape: f32[8,8], index: 3, kind: input, shape index: {}]
  %s4 = inlined_call_operand.vmem [shape: f32[8,1], index: 4, kind: input, shape index: {}]
  %s5 = inlined_call_operand.vmem [shape: f32[8,8], index: 5, kind: input, shape index: {}]
  %s6 = inlined_call_operand.<no memory space> [shape: f32[1,1], index: 6, kind: input, shape index: {}]
  %s7 = inlined_call_operand.vmem [shape: f32[1,128], index: 7, kind: output, shape index: {}]
  %s8 = sld [smem:[#allocation0]]
  $region38: #{predict_crowdfund_v2.1} parent=0
    _
  %s10 = ssub.s32 1, %s8
  %s11 = scalar_select 0, %s10, %s8
  %v12 = vstv %s6
  %13 = vst [vmem:[#allocation2] sm:$0x1] %v12
  // Predicated region
  $region2: #{predict_crowdfund_v2.1} parent=0 // pred_check
    _
  $region3: #{predict_crowdfund_v2.1} parent=0 // pred_check_branch
    %15 = sbr.rel (0) target = $region5
  $region4: #{predict_crowdfund_v2.1} parent=0 // pred_region
    _
  $region5: #{predict_crowdfund_v2.1} parent=0 // pred_fallthru
    _
  // Predicated region
  $region6: #{predict_crowdfund_v2.1} parent=0 // pred_check
    _
  $region7: #{predict_crowdfund_v2.1} parent=0 // pred_check_branch
    %17 = sbr.rel (0) target = $region9
  $region8: #{predict_crowdfund_v2.1} parent=0 // pred_region
    _
  $region9: #{predict_crowdfund_v2.1} parent=0 // pred_fallthru
    _
  // Predicated region
  $region10: #{predict_crowdfund_v2.1} parent=0 // pred_check
    _
  $region11: #{predict_crowdfund_v2.1} parent=0 // pred_check_branch
    %19 = sbr.rel (0) target = $region13
  $region12: #{predict_crowdfund_v2.1} parent=0 // pred_region
    _
  $region13: #{predict_crowdfund_v2.1} parent=0 // pred_fallthru
    _
  // Predicated region
  $region14: #{predict_crowdfund_v2.1} parent=0 // pred_check
    _
  $region15: #{predict_crowdfund_v2.1} parent=0 // pred_check_branch
    %21 = sbr.rel (0) target = $region17
  $region16: #{predict_crowdfund_v2.1} parent=0 // pred_region
    _
  $region17: #{predict_crowdfund_v2.1} parent=0 // pred_fallthru
    _
  // Predicated region
  $region18: #{predict_crowdfund_v2.1} parent=0 // pred_check
    _
  $region19: #{predict_crowdfund_v2.1} parent=0 // pred_check_branch
    %23 = sbr.rel (0) target = $region21
  $region20: #{predict_crowdfund_v2.1} parent=0 // pred_region
    _
  $region21: #{predict_crowdfund_v2.1} parent=0 // pred_fallthru
    _
  // Predicated region
  $region22: #{predict_crowdfund_v2.1} parent=0 // pred_check
    _
  $region23: #{predict_crowdfund_v2.1} parent=0 // pred_check_branch
    %25 = sbr.rel (0) target = $region25
  $region24: #{predict_crowdfund_v2.1} parent=0 // pred_region
    _
  $region25: #{predict_crowdfund_v2.1} parent=0 // pred_fallthru
    _
  // Predicated region
  $region26: #{predict_crowdfund_v2.1} parent=0 // pred_check
    _
  $region27: #{predict_crowdfund_v2.1} parent=0 // pred_check_branch
    %27 = sbr.rel (0) target = $region29
  $region28: #{predict_crowdfund_v2.1} parent=0 // pred_region
    _
  $region29: #{predict_crowdfund_v2.1} parent=0 // pred_fallthru
    _
  %v28 = vld [vmem:[%s0] sm:$0xff]
  %v29 = vld [vmem:[%s1] sm:$0xff]
  %v30 = vld [vmem:[%s2] sm:$0xff]
  %32 = vset.pattern.permute.xlu0 0
  %33 = vperm.xlu0 %32, %v30
  %v34 = vpop.permute.xlu0 %33
  %vm36 = vcmask 64512
  %v38 = vsel %vm36, %v29, 0
  %40 = vmatprep.subr.mxu0 0.0
  %41 = vmatpush1.msra.mxu0 0.0
  %42 = vmatprep.subr.mxu0 0.0
  %43 = vmatpush1.msra.mxu0 0.0
  %44 = vmatprep.subr.mxu0 0.0
  %45 = vmatpush1.msra.mxu0 0.0
  %46 = vmatprep.subr.mxu0 0.0
  %47 = vmatpush1.msra.mxu0 0.0
  %48 = vmatprep.subr.mxu0 0.0
  %49 = vmatpush1.msra.mxu0 0.0
  %50 = vmatprep.subr.mxu0 0.0
  %51 = vmatpush1.msra.mxu0 0.0
  %52 = vmatprep.subr.mxu0 0.0
  %53 = vmatpush1.msra.mxu0 0.0
  %54 = vmatprep.subr.mxu0 0.0
  %55 = vmatpush1.msra.mxu0 0.0
  %56 = vmatprep.subr.mxu0 0.0
  %57 = vmatpush1.msra.mxu0 0.0
  %58 = vmatprep.subr.mxu0 0.0
  %59 = vmatpush1.msra.mxu0 0.0
  %60 = vmatprep.subr.mxu0 0.0
  %61 = vmatpush1.msra.mxu0 0.0
  %62 = vmatprep.subr.mxu0 0.0
  %63 = vmatpush1.msra.mxu0 0.0
  %64 = vmatprep.subr.mxu0 0.0
  %65 = vmatpush1.msra.mxu0 0.0
  %66 = vmatprep.subr.mxu0 0.0
  %67 = vmatpush1.msra.mxu0 0.0
  %68 = vmatprep.subr.mxu0 0.0
  %69 = vmatpush1.msra.mxu0 0.0
  %70 = vmatprep.subr.mxu0 0.0
  %v71 = vand.u32 %v28, 4294901760
  %72 = vmatpush1.msra.mxu0 %v71
  %73 = vmatprep.subr.mxu0 0.0
  %74 = vmatpush2.msra.mxu0 0.0
  %75 = vmatprep.subr.mxu0 0.0
  %76 = vmatpush2.msra.mxu0 0.0
  %77 = vmatprep.subr.mxu0 0.0
  %78 = vmatpush2.msra.mxu0 0.0
  %79 = vmatprep.subr.mxu0 0.0
  %80 = vmatpush2.msra.mxu0 0.0
  %81 = vmatprep.subr.mxu0 0.0
  %82 = vmatpush2.msra.mxu0 0.0
  %83 = vmatprep.subr.mxu0 0.0
  %84 = vmatpush2.msra.mxu0 0.0
  %85 = vmatprep.subr.mxu0 0.0
  %86 = vmatpush2.msra.mxu0 0.0
  %87 = vmatprep.subr.mxu0 0.0
  %88 = vmatpush2.msra.mxu0 0.0
  %89 = vmatprep.subr.mxu0 0.0
  %90 = vmatpush2.msra.mxu0 0.0
  %91 = vmatprep.subr.mxu0 0.0
  %92 = vmatpush2.msra.mxu0 0.0
  %93 = vmatprep.subr.mxu0 0.0
  %94 = vmatpush2.msra.mxu0 0.0
  %95 = vmatprep.subr.mxu0 0.0
  %96 = vmatpush2.msra.mxu0 0.0
  %97 = vmatprep.subr.mxu0 0.0
  %98 = vmatpush2.msra.mxu0 0.0
  %99 = vmatprep.subr.mxu0 0.0
  %100 = vmatpush2.msra.mxu0 0.0
  %101 = vmatprep.subr.mxu0 0.0
  %102 = vmatpush2.msra.mxu0 0.0
  %103 = vmatprep.subr.mxu0 0.0
  %104 = vmatpush2.msra.mxu0 0.0
  %105 = vmatprep.mubr.f32.mxu0 0.0
  %v106 = vand.u32 %v38, 4294901760
  %v107 = vsub.f32 %v38, %v106
  %v108 = vand.u32 %v107, 4294901760
  %v109 = vsub.f32 %v107, %v108
  %v110 = vand.u32 %v109, 4294901760
  %111 = vmatmul.mubr.f32.gmra.mxu0 %v110
  %v112 = vpop.f32.mrf.mxu0
  %v113 = vadd.f32 %v34, %v112
  %v114 = vpop.f32.mrf.mxu0
  %115 = vdwg.mxu0
  %116 = vmatprep.subr.mxu0 0.0
  %117 = vmatpush1.msra.mxu0 0.0
  %118 = vmatprep.subr.mxu0 0.0
  %119 = vmatpush1.msra.mxu0 0.0
  %120 = vmatprep.subr.mxu0 0.0
  %121 = vmatpush1.msra.mxu0 0.0
  %122 = vmatprep.subr.mxu0 0.0
  %123 = vmatpush1.msra.mxu0 0.0
  %124 = vmatprep.subr.mxu0 0.0
  %125 = vmatpush1.msra.mxu0 0.0
  %126 = vmatprep.subr.mxu0 0.0
  %127 = vmatpush1.msra.mxu0 0.0
  %128 = vmatprep.subr.mxu0 0.0
  %129 = vmatpush1.msra.mxu0 0.0
  %130 = vmatprep.subr.mxu0 0.0
  %131 = vmatpush1.msra.mxu0 0.0
  %132 = vmatprep.subr.mxu0 0.0
  %133 = vmatpush1.msra.mxu0 0.0
  %134 = vmatprep.subr.mxu0 0.0
  %135 = vmatpush1.msra.mxu0 0.0
  %136 = vmatprep.subr.mxu0 0.0
  %137 = vmatpush1.msra.mxu0 0.0
  %138 = vmatprep.subr.mxu0 0.0
  %139 = vmatpush1.msra.mxu0 0.0
  %140 = vmatprep.subr.mxu0 0.0
  %141 = vmatpush1.msra.mxu0 0.0
  %142 = vmatprep.subr.mxu0 0.0
  %143 = vmatpush1.msra.mxu0 0.0
  %144 = vmatprep.subr.mxu0 0.0
  %145 = vmatpush1.msra.mxu0 0.0
  %146 = vmatprep.subr.mxu0 0.0
  %v147 = vand.u32 %v28, 4294901760
  %v148 = vsub.f32 %v28, %v147
  %v149 = vand.u32 %v148, 4294901760
  %v150 = vsub.f32 %v148, %v149
  %v151 = vand.u32 %v150, 4294901760
  %152 = vmatpush1.msra.mxu0 %v151
  %153 = vmatprep.subr.mxu0 0.0
  %154 = vmatpush2.msra.mxu0 0.0
  %155 = vmatprep.subr.mxu0 0.0
  %156 = vmatpush2.msra.mxu0 0.0
  %157 = vmatprep.subr.mxu0 0.0
  %158 = vmatpush2.msra.mxu0 0.0
  %159 = vmatprep.subr.mxu0 0.0
  %160 = vmatpush2.msra.mxu0 0.0
  %161 = vmatprep.subr.mxu0 0.0
  %162 = vmatpush2.msra.mxu0 0.0
  %163 = vmatprep.subr.mxu0 0.0
  %164 = vmatpush2.msra.mxu0 0.0
  %165 = vmatprep.subr.mxu0 0.0
  %166 = vmatpush2.msra.mxu0 0.0
  %167 = vmatprep.subr.mxu0 0.0
  %168 = vmatpush2.msra.mxu0 0.0
  %169 = vmatprep.subr.mxu0 0.0
  %170 = vmatpush2.msra.mxu0 0.0
  %171 = vmatprep.subr.mxu0 0.0
  %172 = vmatpush2.msra.mxu0 0.0
  %173 = vmatprep.subr.mxu0 0.0
  %174 = vmatpush2.msra.mxu0 0.0
  %175 = vmatprep.subr.mxu0 0.0
  %176 = vmatpush2.msra.mxu0 0.0
  %177 = vmatprep.subr.mxu0 0.0
  %178 = vmatpush2.msra.mxu0 0.0
  %179 = vmatprep.subr.mxu0 0.0
  %180 = vmatpush2.msra.mxu0 0.0
  %181 = vmatprep.subr.mxu0 0.0
  %182 = vmatpush2.msra.mxu0 0.0
  %183 = vmatprep.subr.mxu0 0.0
  %184 = vmatpush2.msra.mxu0 0.0
  %185 = vmatprep.mubr.f32.mxu0 0.0
  %v186 = vand.u32 %v38, 4294901760
  %187 = vmatmul.mubr.f32.gmra.mxu0 %v186
  %v188 = vpop.f32.mrf.mxu0
  %v189 = vadd.f32 %v113, %v188
  %v190 = vpop.f32.mrf.mxu0
  %191 = vdwg.mxu0
  %192 = vmatprep.subr.mxu0 0.0
  %193 = vmatpush1.msra.mxu0 0.0
  %194 = vmatprep.subr.mxu0 0.0
  %195 = vmatpush1.msra.mxu0 0.0
  %196 = vmatprep.subr.mxu0 0.0
  %197 = vmatpush1.msra.mxu0 0.0
  %198 = vmatprep.subr.mxu0 0.0
  %199 = vmatpush1.msra.mxu0 0.0
  %200 = vmatprep.subr.mxu0 0.0
  %201 = vmatpush1.msra.mxu0 0.0
  %202 = vmatprep.subr.mxu0 0.0
  %203 = vmatpush1.msra.mxu0 0.0
  %204 = vmatprep.subr.mxu0 0.0
  %205 = vmatpush1.msra.mxu0 0.0
  %206 = vmatprep.subr.mxu0 0.0
  %207 = vmatpush1.msra.mxu0 0.0
  %208 = vmatprep.subr.mxu0 0.0
  %209 = vmatpush1.msra.mxu0 0.0
  %210 = vmatprep.subr.mxu0 0.0
  %211 = vmatpush1.msra.mxu0 0.0
  %212 = vmatprep.subr.mxu0 0.0
  %213 = vmatpush1.msra.mxu0 0.0
  %214 = vmatprep.subr.mxu0 0.0
  %215 = vmatpush1.msra.mxu0 0.0
  %216 = vmatprep.subr.mxu0 0.0
  %217 = vmatpush1.msra.mxu0 0.0
  %218 = vmatprep.subr.mxu0 0.0
  %219 = vmatpush1.msra.mxu0 0.0
  %220 = vmatprep.subr.mxu0 0.0
  %221 = vmatpush1.msra.mxu0 0.0
  %222 = vmatprep.subr.mxu0 0.0
  %v223 = vand.u32 %v28, 4294901760
  %v224 = vsub.f32 %v28, %v223
  %225 = vmatpush1.msra.mxu0 %v224
  %226 = vmatprep.subr.mxu0 0.0
  %227 = vmatpush2.msra.mxu0 0.0
  %228 = vmatprep.subr.mxu0 0.0
  %229 = vmatpush2.msra.mxu0 0.0
  %230 = vmatprep.subr.mxu0 0.0
  %231 = vmatpush2.msra.mxu0 0.0
  %232 = vmatprep.subr.mxu0 0.0
  %233 = vmatpush2.msra.mxu0 0.0
  %234 = vmatprep.subr.mxu0 0.0
  %235 = vmatpush2.msra.mxu0 0.0
  %236 = vmatprep.subr.mxu0 0.0
  %237 = vmatpush2.msra.mxu0 0.0
  %238 = vmatprep.subr.mxu0 0.0
  %239 = vmatpush2.msra.mxu0 0.0
  %240 = vmatprep.subr.mxu0 0.0
  %241 = vmatpush2.msra.mxu0 0.0
  %242 = vmatprep.subr.mxu0 0.0
  %243 = vmatpush2.msra.mxu0 0.0
  %244 = vmatprep.subr.mxu0 0.0
  %245 = vmatpush2.msra.mxu0 0.0
  %246 = vmatprep.subr.mxu0 0.0
  %247 = vmatpush2.msra.mxu0 0.0
  %248 = vmatprep.subr.mxu0 0.0
  %249 = vmatpush2.msra.mxu0 0.0
  %250 = vmatprep.subr.mxu0 0.0
  %251 = vmatpush2.msra.mxu0 0.0
  %252 = vmatprep.subr.mxu0 0.0
  %253 = vmatpush2.msra.mxu0 0.0
  %254 = vmatprep.subr.mxu0 0.0
  %255 = vmatpush2.msra.mxu0 0.0
  %256 = vmatprep.subr.mxu0 0.0
  %257 = vmatpush2.msra.mxu0 0.0
  %258 = vmatprep.mubr.f32.mxu0 0.0
  %v259 = vand.u32 %v38, 4294901760
  %v260 = vsub.f32 %v38, %v259
  %261 = vmatmul.mubr.f32.gmra.mxu0 %v260
  %v262 = vpop.f32.mrf.mxu0
  %v263 = vadd.f32 %v189, %v262
  %v264 = vpop.f32.mrf.mxu0
  %265 = vdwg.mxu0
  %266 = vmatprep.subr.mxu0 0.0
  %267 = vmatpush1.msra.mxu0 0.0
  %268 = vmatprep.subr.mxu0 0.0
  %269 = vmatpush1.msra.mxu0 0.0
  %270 = vmatprep.subr.mxu0 0.0
  %271 = vmatpush1.msra.mxu0 0.0
  %272 = vmatprep.subr.mxu0 0.0
  %273 = vmatpush1.msra.mxu0 0.0
  %274 = vmatprep.subr.mxu0 0.0
  %275 = vmatpush1.msra.mxu0 0.0
  %276 = vmatprep.subr.mxu0 0.0
  %277 = vmatpush1.msra.mxu0 0.0
  %278 = vmatprep.subr.mxu0 0.0
  %279 = vmatpush1.msra.mxu0 0.0
  %280 = vmatprep.subr.mxu0 0.0
  %281 = vmatpush1.msra.mxu0 0.0
  %282 = vmatprep.subr.mxu0 0.0
  %283 = vmatpush1.msra.mxu0 0.0
  %284 = vmatprep.subr.mxu0 0.0
  %285 = vmatpush1.msra.mxu0 0.0
  %286 = vmatprep.subr.mxu0 0.0
  %287 = vmatpush1.msra.mxu0 0.0
  %288 = vmatprep.subr.mxu0 0.0
  %289 = vmatpush1.msra.mxu0 0.0
  %290 = vmatprep.subr.mxu0 0.0
  %291 = vmatpush1.msra.mxu0 0.0
  %292 = vmatprep.subr.mxu0 0.0
  %293 = vmatpush1.msra.mxu0 0.0
  %294 = vmatprep.subr.mxu0 0.0
  %295 = vmatpush1.msra.mxu0 0.0
  %296 = vmatprep.subr.mxu0 0.0
  %v297 = vand.u32 %v28, 4294901760
  %298 = vmatpush1.msra.mxu0 %v297
  %299 = vmatprep.subr.mxu0 0.0
  %300 = vmatpush2.msra.mxu0 0.0
  %301 = vmatprep.subr.mxu0 0.0
  %302 = vmatpush2.msra.mxu0 0.0
  %303 = vmatprep.subr.mxu0 0.0
  %304 = vmatpush2.msra.mxu0 0.0
  %305 = vmatprep.subr.mxu0 0.0
  %306 = vmatpush2.msra.mxu0 0.0
  %307 = vmatprep.subr.mxu0 0.0
  %308 = vmatpush2.msra.mxu0 0.0
  %309 = vmatprep.subr.mxu0 0.0
  %310 = vmatpush2.msra.mxu0 0.0
  %311 = vmatprep.subr.mxu0 0.0
  %312 = vmatpush2.msra.mxu0 0.0
  %313 = vmatprep.subr.mxu0 0.0
  %314 = vmatpush2.msra.mxu0 0.0
  %315 = vmatprep.subr.mxu0 0.0
  %316 = vmatpush2.msra.mxu0 0.0
  %317 = vmatprep.subr.mxu0 0.0
  %318 = vmatpush2.msra.mxu0 0.0
  %319 = vmatprep.subr.mxu0 0.0
  %320 = vmatpush2.msra.mxu0 0.0
  %321 = vmatprep.subr.mxu0 0.0
  %322 = vmatpush2.msra.mxu0 0.0
  %323 = vmatprep.subr.mxu0 0.0
  %324 = vmatpush2.msra.mxu0 0.0
  %325 = vmatprep.subr.mxu0 0.0
  %326 = vmatpush2.msra.mxu0 0.0
  %327 = vmatprep.subr.mxu0 0.0
  %328 = vmatpush2.msra.mxu0 0.0
  %329 = vmatprep.subr.mxu0 0.0
  %330 = vmatpush2.msra.mxu0 0.0
  %331 = vmatprep.mubr.f32.mxu0 0.0
  %v332 = vand.u32 %v38, 4294901760
  %v333 = vsub.f32 %v38, %v332
  %v334 = vand.u32 %v333, 4294901760
  %335 = vmatmul.mubr.f32.gmra.mxu0 %v334
  %v336 = vpop.f32.mrf.mxu0
  %v337 = vadd.f32 %v263, %v336
  %v338 = vpop.f32.mrf.mxu0
  %339 = vdwg.mxu0
  %340 = vmatprep.subr.mxu0 0.0
  %341 = vmatpush1.msra.mxu0 0.0
  %342 = vmatprep.subr.mxu0 0.0
  %343 = vmatpush1.msra.mxu0 0.0
  %344 = vmatprep.subr.mxu0 0.0
  %345 = vmatpush1.msra.mxu0 0.0
  %346 = vmatprep.subr.mxu0 0.0
  %347 = vmatpush1.msra.mxu0 0.0
  %348 = vmatprep.subr.mxu0 0.0
  %349 = vmatpush1.msra.mxu0 0.0
  %350 = vmatprep.subr.mxu0 0.0
  %351 = vmatpush1.msra.mxu0 0.0
  %352 = vmatprep.subr.mxu0 0.0
  %353 = vmatpush1.msra.mxu0 0.0
  %354 = vmatprep.subr.mxu0 0.0
  %355 = vmatpush1.msra.mxu0 0.0
  %356 = vmatprep.subr.mxu0 0.0
  %357 = vmatpush1.msra.mxu0 0.0
  %358 = vmatprep.subr.mxu0 0.0
  %359 = vmatpush1.msra.mxu0 0.0
  %360 = vmatprep.subr.mxu0 0.0
  %361 = vmatpush1.msra.mxu0 0.0
  %362 = vmatprep.subr.mxu0 0.0
  %363 = vmatpush1.msra.mxu0 0.0
  %364 = vmatprep.subr.mxu0 0.0
  %365 = vmatpush1.msra.mxu0 0.0
  %366 = vmatprep.subr.mxu0 0.0
  %367 = vmatpush1.msra.mxu0 0.0
  %368 = vmatprep.subr.mxu0 0.0
  %369 = vmatpush1.msra.mxu0 0.0
  %370 = vmatprep.subr.mxu0 0.0
  %v371 = vand.u32 %v28, 4294901760
  %v372 = vsub.f32 %v28, %v371
  %v373 = vand.u32 %v372, 4294901760
  %374 = vmatpush1.msra.mxu0 %v373
  %375 = vmatprep.subr.mxu0 0.0
  %376 = vmatpush2.msra.mxu0 0.0
  %377 = vmatprep.subr.mxu0 0.0
  %378 = vmatpush2.msra.mxu0 0.0
  %379 = vmatprep.subr.mxu0 0.0
  %380 = vmatpush2.msra.mxu0 0.0
  %381 = vmatprep.subr.mxu0 0.0
  %382 = vmatpush2.msra.mxu0 0.0
  %383 = vmatprep.subr.mxu0 0.0
  %384 = vmatpush2.msra.mxu0 0.0
  %385 = vmatprep.subr.mxu0 0.0
  %386 = vmatpush2.msra.mxu0 0.0
  %387 = vmatprep.subr.mxu0 0.0
  %388 = vmatpush2.msra.mxu0 0.0
  %389 = vmatprep.subr.mxu0 0.0
  %390 = vmatpush2.msra.mxu0 0.0
  %391 = vmatprep.subr.mxu0 0.0
  %392 = vmatpush2.msra.mxu0 0.0
  %393 = vmatprep.subr.mxu0 0.0
  %394 = vmatpush2.msra.mxu0 0.0
  %395 = vmatprep.subr.mxu0 0.0
  %396 = vmatpush2.msra.mxu0 0.0
  %397 = vmatprep.subr.mxu0 0.0
  %398 = vmatpush2.msra.mxu0 0.0
  %399 = vmatprep.subr.mxu0 0.0
  %400 = vmatpush2.msra.mxu0 0.0
  %401 = vmatprep.subr.mxu0 0.0
  %402 = vmatpush2.msra.mxu0 0.0
  %403 = vmatprep.subr.mxu0 0.0
  %404 = vmatpush2.msra.mxu0 0.0
  %405 = vmatprep.subr.mxu0 0.0
  %406 = vmatpush2.msra.mxu0 0.0
  %407 = vmatprep.mubr.f32.mxu0 0.0
  %v408 = vand.u32 %v38, 4294901760
  %409 = vmatmul.mubr.f32.gmra.mxu0 %v408
  %v410 = vpop.f32.mrf.mxu0
  %v411 = vadd.f32 %v337, %v410
  %v412 = vpop.f32.mrf.mxu0
  %413 = vdwg.mxu0
  %414 = vmatprep.subr.mxu0 0.0
  %415 = vmatpush1.msra.mxu0 0.0
  %416 = vmatprep.subr.mxu0 0.0
  %417 = vmatpush1.msra.mxu0 0.0
  %418 = vmatprep.subr.mxu0 0.0
  %419 = vmatpush1.msra.mxu0 0.0
  %420 = vmatprep.subr.mxu0 0.0
  %421 = vmatpush1.msra.mxu0 0.0
  %422 = vmatprep.subr.mxu0 0.0
  %423 = vmatpush1.msra.mxu0 0.0
  %424 = vmatprep.subr.mxu0 0.0
  %425 = vmatpush1.msra.mxu0 0.0
  %426 = vmatprep.subr.mxu0 0.0
  %427 = vmatpush1.msra.mxu0 0.0
  %428 = vmatprep.subr.mxu0 0.0
  %429 = vmatpush1.msra.mxu0 0.0
  %430 = vmatprep.subr.mxu0 0.0
  %431 = vmatpush1.msra.mxu0 0.0
  %432 = vmatprep.subr.mxu0 0.0
  %433 = vmatpush1.msra.mxu0 0.0
  %434 = vmatprep.subr.mxu0 0.0
  %435 = vmatpush1.msra.mxu0 0.0
  %436 = vmatprep.subr.mxu0 0.0
  %437 = vmatpush1.msra.mxu0 0.0
  %438 = vmatprep.subr.mxu0 0.0
  %439 = vmatpush1.msra.mxu0 0.0
  %440 = vmatprep.subr.mxu0 0.0
  %441 = vmatpush1.msra.mxu0 0.0
  %442 = vmatprep.subr.mxu0 0.0
  %443 = vmatpush1.msra.mxu0 0.0
  %444 = vmatprep.subr.mxu0 0.0
  %v445 = vand.u32 %v28, 4294901760
  %446 = vmatpush1.msra.mxu0 %v445
  %447 = vmatprep.subr.mxu0 0.0
  %448 = vmatpush2.msra.mxu0 0.0
  %449 = vmatprep.subr.mxu0 0.0
  %450 = vmatpush2.msra.mxu0 0.0
  %451 = vmatprep.subr.mxu0 0.0
  %452 = vmatpush2.msra.mxu0 0.0
  %453 = vmatprep.subr.mxu0 0.0
  %454 = vmatpush2.msra.mxu0 0.0
  %455 = vmatprep.subr.mxu0 0.0
  %456 = vmatpush2.msra.mxu0 0.0
  %457 = vmatprep.subr.mxu0 0.0
  %458 = vmatpush2.msra.mxu0 0.0
  %459 = vmatprep.subr.mxu0 0.0
  %460 = vmatpush2.msra.mxu0 0.0
  %461 = vmatprep.subr.mxu0 0.0
  %462 = vmatpush2.msra.mxu0 0.0
  %463 = vmatprep.subr.mxu0 0.0
  %464 = vmatpush2.msra.mxu0 0.0
  %465 = vmatprep.subr.mxu0 0.0
  %466 = vmatpush2.msra.mxu0 0.0
  %467 = vmatprep.subr.mxu0 0.0
  %468 = vmatpush2.msra.mxu0 0.0
  %469 = vmatprep.subr.mxu0 0.0
  %470 = vmatpush2.msra.mxu0 0.0
  %471 = vmatprep.subr.mxu0 0.0
  %472 = vmatpush2.msra.mxu0 0.0
  %473 = vmatprep.subr.mxu0 0.0
  %474 = vmatpush2.msra.mxu0 0.0
  %475 = vmatprep.subr.mxu0 0.0
  %476 = vmatpush2.msra.mxu0 0.0
  %477 = vmatprep.subr.mxu0 0.0
  %478 = vmatpush2.msra.mxu0 0.0
  %479 = vmatprep.mubr.f32.mxu0 0.0
  %v480 = vand.u32 %v38, 4294901760
  %481 = vmatmul.mubr.f32.gmra.mxu0 %v480
  %v482 = vpop.f32.mrf.mxu0
  %v483 = vadd.f32 %v411, %v482
  %v484 = vpop.f32.mrf.mxu0
  %485 = vdwg.mxu0
  %v486 = vmax.f32 %v483, 0.0
  %v487 = vld [vmem:[%s3] sm:$0xff]
  %v488 = vld [vmem:[%s4] sm:$0xff]
  %490 = vset.pattern.permute.xlu0 0
  %491 = vperm.xlu0 %490, %v488
  %v492 = vpop.permute.xlu0 %491
  %v495 = vsel %vm36, %v487, 0
  %497 = vmatprep.subr.mxu0 0.0
  %498 = vmatpush1.msra.mxu0 0.0
  %499 = vmatprep.subr.mxu0 0.0
  %500 = vmatpush1.msra.mxu0 0.0
  %501 = vmatprep.subr.mxu0 0.0
  %502 = vmatpush1.msra.mxu0 0.0
  %503 = vmatprep.subr.mxu0 0.0
  %504 = vmatpush1.msra.mxu0 0.0
  %505 = vmatprep.subr.mxu0 0.0
  %506 = vmatpush1.msra.mxu0 0.0
  %507 = vmatprep.subr.mxu0 0.0
  %508 = vmatpush1.msra.mxu0 0.0
  %509 = vmatprep.subr.mxu0 0.0
  %510 = vmatpush1.msra.mxu0 0.0
  %511 = vmatprep.subr.mxu0 0.0
  %512 = vmatpush1.msra.mxu0 0.0
  %513 = vmatprep.subr.mxu0 0.0
  %514 = vmatpush1.msra.mxu0 0.0
  %515 = vmatprep.subr.mxu0 0.0
  %516 = vmatpush1.msra.mxu0 0.0
  %517 = vmatprep.subr.mxu0 0.0
  %518 = vmatpush1.msra.mxu0 0.0
  %519 = vmatprep.subr.mxu0 0.0
  %520 = vmatpush1.msra.mxu0 0.0
  %521 = vmatprep.subr.mxu0 0.0
  %522 = vmatpush1.msra.mxu0 0.0
  %523 = vmatprep.subr.mxu0 0.0
  %524 = vmatpush1.msra.mxu0 0.0
  %525 = vmatprep.subr.mxu0 0.0
  %526 = vmatpush1.msra.mxu0 0.0
  %527 = vmatprep.subr.mxu0 0.0
  %v528 = vand.u32 %v486, 4294901760
  %529 = vmatpush1.msra.mxu0 %v528
  %530 = vmatprep.subr.mxu0 0.0
  %531 = vmatpush2.msra.mxu0 0.0
  %532 = vmatprep.subr.mxu0 0.0
  %533 = vmatpush2.msra.mxu0 0.0
  %534 = vmatprep.subr.mxu0 0.0
  %535 = vmatpush2.msra.mxu0 0.0
  %536 = vmatprep.subr.mxu0 0.0
  %537 = vmatpush2.msra.mxu0 0.0
  %538 = vmatprep.subr.mxu0 0.0
  %539 = vmatpush2.msra.mxu0 0.0
  %540 = vmatprep.subr.mxu0 0.0
  %541 = vmatpush2.msra.mxu0 0.0
  %542 = vmatprep.subr.mxu0 0.0
  %543 = vmatpush2.msra.mxu0 0.0
  %544 = vmatprep.subr.mxu0 0.0
  %545 = vmatpush2.msra.mxu0 0.0
  %546 = vmatprep.subr.mxu0 0.0
  %547 = vmatpush2.msra.mxu0 0.0
  %548 = vmatprep.subr.mxu0 0.0
  %549 = vmatpush2.msra.mxu0 0.0
  %550 = vmatprep.subr.mxu0 0.0
  %551 = vmatpush2.msra.mxu0 0.0
  %552 = vmatprep.subr.mxu0 0.0
  %553 = vmatpush2.msra.mxu0 0.0
  %554 = vmatprep.subr.mxu0 0.0
  %555 = vmatpush2.msra.mxu0 0.0
  %556 = vmatprep.subr.mxu0 0.0
  %557 = vmatpush2.msra.mxu0 0.0
  %558 = vmatprep.subr.mxu0 0.0
  %559 = vmatpush2.msra.mxu0 0.0
  %560 = vmatprep.subr.mxu0 0.0
  %561 = vmatpush2.msra.mxu0 0.0
  %562 = vmatprep.mubr.f32.mxu0 0.0
  %v563 = vand.u32 %v495, 4294901760
  %v564 = vsub.f32 %v495, %v563
  %v565 = vand.u32 %v564, 4294901760
  %v566 = vsub.f32 %v564, %v565
  %v567 = vand.u32 %v566, 4294901760
  %568 = vmatmul.mubr.f32.gmra.mxu0 %v567
  %v569 = vpop.f32.mrf.mxu0
  %v570 = vadd.f32 %v492, %v569
  %v571 = vpop.f32.mrf.mxu0
  %572 = vdwg.mxu0
  %573 = vmatprep.subr.mxu0 0.0
  %574 = vmatpush1.msra.mxu0 0.0
  %575 = vmatprep.subr.mxu0 0.0
  %576 = vmatpush1.msra.mxu0 0.0
  %577 = vmatprep.subr.mxu0 0.0
  %578 = vmatpush1.msra.mxu0 0.0
  %579 = vmatprep.subr.mxu0 0.0
  %580 = vmatpush1.msra.mxu0 0.0
  %581 = vmatprep.subr.mxu0 0.0
  %582 = vmatpush1.msra.mxu0 0.0
  %583 = vmatprep.subr.mxu0 0.0
  %584 = vmatpush1.msra.mxu0 0.0
  %585 = vmatprep.subr.mxu0 0.0
  %586 = vmatpush1.msra.mxu0 0.0
  %587 = vmatprep.subr.mxu0 0.0
  %588 = vmatpush1.msra.mxu0 0.0
  %589 = vmatprep.subr.mxu0 0.0
  %590 = vmatpush1.msra.mxu0 0.0
  %591 = vmatprep.subr.mxu0 0.0
  %592 = vmatpush1.msra.mxu0 0.0
  %593 = vmatprep.subr.mxu0 0.0
  %594 = vmatpush1.msra.mxu0 0.0
  %595 = vmatprep.subr.mxu0 0.0
  %596 = vmatpush1.msra.mxu0 0.0
  %597 = vmatprep.subr.mxu0 0.0
  %598 = vmatpush1.msra.mxu0 0.0
  %599 = vmatprep.subr.mxu0 0.0
  %600 = vmatpush1.msra.mxu0 0.0
  %601 = vmatprep.subr.mxu0 0.0
  %602 = vmatpush1.msra.mxu0 0.0
  %603 = vmatprep.subr.mxu0 0.0
  %v604 = vand.u32 %v486, 4294901760
  %v605 = vsub.f32 %v486, %v604
  %v606 = vand.u32 %v605, 4294901760
  %v607 = vsub.f32 %v605, %v606
  %v608 = vand.u32 %v607, 4294901760
  %609 = vmatpush1.msra.mxu0 %v608
  %610 = vmatprep.subr.mxu0 0.0
  %611 = vmatpush2.msra.mxu0 0.0
  %612 = vmatprep.subr.mxu0 0.0
  %613 = vmatpush2.msra.mxu0 0.0
  %614 = vmatprep.subr.mxu0 0.0
  %615 = vmatpush2.msra.mxu0 0.0
  %616 = vmatprep.subr.mxu0 0.0
  %617 = vmatpush2.msra.mxu0 0.0
  %618 = vmatprep.subr.mxu0 0.0
  %619 = vmatpush2.msra.mxu0 0.0
  %620 = vmatprep.subr.mxu0 0.0
  %621 = vmatpush2.msra.mxu0 0.0
  %622 = vmatprep.subr.mxu0 0.0
  %623 = vmatpush2.msra.mxu0 0.0
  %624 = vmatprep.subr.mxu0 0.0
  %625 = vmatpush2.msra.mxu0 0.0
  %626 = vmatprep.subr.mxu0 0.0
  %627 = vmatpush2.msra.mxu0 0.0
  %628 = vmatprep.subr.mxu0 0.0
  %629 = vmatpush2.msra.mxu0 0.0
  %630 = vmatprep.subr.mxu0 0.0
  %631 = vmatpush2.msra.mxu0 0.0
  %632 = vmatprep.subr.mxu0 0.0
  %633 = vmatpush2.msra.mxu0 0.0
  %634 = vmatprep.subr.mxu0 0.0
  %635 = vmatpush2.msra.mxu0 0.0
  %636 = vmatprep.subr.mxu0 0.0
  %637 = vmatpush2.msra.mxu0 0.0
  %638 = vmatprep.subr.mxu0 0.0
  %639 = vmatpush2.msra.mxu0 0.0
  %640 = vmatprep.subr.mxu0 0.0
  %641 = vmatpush2.msra.mxu0 0.0
  %642 = vmatprep.mubr.f32.mxu0 0.0
  %v643 = vand.u32 %v495, 4294901760
  %644 = vmatmul.mubr.f32.gmra.mxu0 %v643
  %v645 = vpop.f32.mrf.mxu0
  %v646 = vadd.f32 %v570, %v645
  %v647 = vpop.f32.mrf.mxu0
  %648 = vdwg.mxu0
  %649 = vmatprep.subr.mxu0 0.0
  %650 = vmatpush1.msra.mxu0 0.0
  %651 = vmatprep.subr.mxu0 0.0
  %652 = vmatpush1.msra.mxu0 0.0
  %653 = vmatprep.subr.mxu0 0.0
  %654 = vmatpush1.msra.mxu0 0.0
  %655 = vmatprep.subr.mxu0 0.0
  %656 = vmatpush1.msra.mxu0 0.0
  %657 = vmatprep.subr.mxu0 0.0
  %658 = vmatpush1.msra.mxu0 0.0
  %659 = vmatprep.subr.mxu0 0.0
  %660 = vmatpush1.msra.mxu0 0.0
  %661 = vmatprep.subr.mxu0 0.0
  %662 = vmatpush1.msra.mxu0 0.0
  %663 = vmatprep.subr.mxu0 0.0
  %664 = vmatpush1.msra.mxu0 0.0
  %665 = vmatprep.subr.mxu0 0.0
  %666 = vmatpush1.msra.mxu0 0.0
  %667 = vmatprep.subr.mxu0 0.0
  %668 = vmatpush1.msra.mxu0 0.0
  %669 = vmatprep.subr.mxu0 0.0
  %670 = vmatpush1.msra.mxu0 0.0
  %671 = vmatprep.subr.mxu0 0.0
  %672 = vmatpush1.msra.mxu0 0.0
  %673 = vmatprep.subr.mxu0 0.0
  %674 = vmatpush1.msra.mxu0 0.0
  %675 = vmatprep.subr.mxu0 0.0
  %676 = vmatpush1.msra.mxu0 0.0
  %677 = vmatprep.subr.mxu0 0.0
  %678 = vmatpush1.msra.mxu0 0.0
  %679 = vmatprep.subr.mxu0 0.0
  %v680 = vand.u32 %v486, 4294901760
  %v681 = vsub.f32 %v486, %v680
  %682 = vmatpush1.msra.mxu0 %v681
  %683 = vmatprep.subr.mxu0 0.0
  %684 = vmatpush2.msra.mxu0 0.0
  %685 = vmatprep.subr.mxu0 0.0
  %686 = vmatpush2.msra.mxu0 0.0
  %687 = vmatprep.subr.mxu0 0.0
  %688 = vmatpush2.msra.mxu0 0.0
  %689 = vmatprep.subr.mxu0 0.0
  %690 = vmatpush2.msra.mxu0 0.0
  %691 = vmatprep.subr.mxu0 0.0
  %692 = vmatpush2.msra.mxu0 0.0
  %693 = vmatprep.subr.mxu0 0.0
  %694 = vmatpush2.msra.mxu0 0.0
  %695 = vmatprep.subr.mxu0 0.0
  %696 = vmatpush2.msra.mxu0 0.0
  %697 = vmatprep.subr.mxu0 0.0
  %698 = vmatpush2.msra.mxu0 0.0
  %699 = vmatprep.subr.mxu0 0.0
  %700 = vmatpush2.msra.mxu0 0.0
  %701 = vmatprep.subr.mxu0 0.0
  %702 = vmatpush2.msra.mxu0 0.0
  %703 = vmatprep.subr.mxu0 0.0
  %704 = vmatpush2.msra.mxu0 0.0
  %705 = vmatprep.subr.mxu0 0.0
  %706 = vmatpush2.msra.mxu0 0.0
  %707 = vmatprep.subr.mxu0 0.0
  %708 = vmatpush2.msra.mxu0 0.0
  %709 = vmatprep.subr.mxu0 0.0
  %710 = vmatpush2.msra.mxu0 0.0
  %711 = vmatprep.subr.mxu0 0.0
  %712 = vmatpush2.msra.mxu0 0.0
  %713 = vmatprep.subr.mxu0 0.0
  %714 = vmatpush2.msra.mxu0 0.0
  %715 = vmatprep.mubr.f32.mxu0 0.0
  %v716 = vand.u32 %v495, 4294901760
  %v717 = vsub.f32 %v495, %v716
  %718 = vmatmul.mubr.f32.gmra.mxu0 %v717
  %v719 = vpop.f32.mrf.mxu0
  %v720 = vadd.f32 %v646, %v719
  %v721 = vpop.f32.mrf.mxu0
  %722 = vdwg.mxu0
  %723 = vmatprep.subr.mxu0 0.0
  %724 = vmatpush1.msra.mxu0 0.0
  %725 = vmatprep.subr.mxu0 0.0
  %726 = vmatpush1.msra.mxu0 0.0
  %727 = vmatprep.subr.mxu0 0.0
  %728 = vmatpush1.msra.mxu0 0.0
  %729 = vmatprep.subr.mxu0 0.0
  %730 = vmatpush1.msra.mxu0 0.0
  %731 = vmatprep.subr.mxu0 0.0
  %732 = vmatpush1.msra.mxu0 0.0
  %733 = vmatprep.subr.mxu0 0.0
  %734 = vmatpush1.msra.mxu0 0.0
  %735 = vmatprep.subr.mxu0 0.0
  %736 = vmatpush1.msra.mxu0 0.0
  %737 = vmatprep.subr.mxu0 0.0
  %738 = vmatpush1.msra.mxu0 0.0
  %739 = vmatprep.subr.mxu0 0.0
  %740 = vmatpush1.msra.mxu0 0.0
  %741 = vmatprep.subr.mxu0 0.0
  %742 = vmatpush1.msra.mxu0 0.0
  %743 = vmatprep.subr.mxu0 0.0
  %744 = vmatpush1.msra.mxu0 0.0
  %745 = vmatprep.subr.mxu0 0.0
  %746 = vmatpush1.msra.mxu0 0.0
  %747 = vmatprep.subr.mxu0 0.0
  %748 = vmatpush1.msra.mxu0 0.0
  %749 = vmatprep.subr.mxu0 0.0
  %750 = vmatpush1.msra.mxu0 0.0
  %751 = vmatprep.subr.mxu0 0.0
  %752 = vmatpush1.msra.mxu0 0.0
  %753 = vmatprep.subr.mxu0 0.0
  %v754 = vand.u32 %v486, 4294901760
  %755 = vmatpush1.msra.mxu0 %v754
  %756 = vmatprep.subr.mxu0 0.0
  %757 = vmatpush2.msra.mxu0 0.0
  %758 = vmatprep.subr.mxu0 0.0
  %759 = vmatpush2.msra.mxu0 0.0
  %760 = vmatprep.subr.mxu0 0.0
  %761 = vmatpush2.msra.mxu0 0.0
  %762 = vmatprep.subr.mxu0 0.0
  %763 = vmatpush2.msra.mxu0 0.0
  %764 = vmatprep.subr.mxu0 0.0
  %765 = vmatpush2.msra.mxu0 0.0
  %766 = vmatprep.subr.mxu0 0.0
  %767 = vmatpush2.msra.mxu0 0.0
  %768 = vmatprep.subr.mxu0 0.0
  %769 = vmatpush2.msra.mxu0 0.0
  %770 = vmatprep.subr.mxu0 0.0
  %771 = vmatpush2.msra.mxu0 0.0
  %772 = vmatprep.subr.mxu0 0.0
  %773 = vmatpush2.msra.mxu0 0.0
  %774 = vmatprep.subr.mxu0 0.0
  %775 = vmatpush2.msra.mxu0 0.0
  %776 = vmatprep.subr.mxu0 0.0
  %777 = vmatpush2.msra.mxu0 0.0
  %778 = vmatprep.subr.mxu0 0.0
  %779 = vmatpush2.msra.mxu0 0.0
  %780 = vmatprep.subr.mxu0 0.0
  %781 = vmatpush2.msra.mxu0 0.0
  %782 = vmatprep.subr.mxu0 0.0
  %783 = vmatpush2.msra.mxu0 0.0
  %784 = vmatprep.subr.mxu0 0.0
  %785 = vmatpush2.msra.mxu0 0.0
  %786 = vmatprep.subr.mxu0 0.0
  %787 = vmatpush2.msra.mxu0 0.0
  %788 = vmatprep.mubr.f32.mxu0 0.0
  %v789 = vand.u32 %v495, 4294901760
  %v790 = vsub.f32 %v495, %v789
  %v791 = vand.u32 %v790, 4294901760
  %792 = vmatmul.mubr.f32.gmra.mxu0 %v791
  %v793 = vpop.f32.mrf.mxu0
  %v794 = vadd.f32 %v720, %v793
  %v795 = vpop.f32.mrf.mxu0
  %796 = vdwg.mxu0
  %797 = vmatprep.subr.mxu0 0.0
  %798 = vmatpush1.msra.mxu0 0.0
  %799 = vmatprep.subr.mxu0 0.0
  %800 = vmatpush1.msra.mxu0 0.0
  %801 = vmatprep.subr.mxu0 0.0
  %802 = vmatpush1.msra.mxu0 0.0
  %803 = vmatprep.subr.mxu0 0.0
  %804 = vmatpush1.msra.mxu0 0.0
  %805 = vmatprep.subr.mxu0 0.0
  %806 = vmatpush1.msra.mxu0 0.0
  %807 = vmatprep.subr.mxu0 0.0
  %808 = vmatpush1.msra.mxu0 0.0
  %809 = vmatprep.subr.mxu0 0.0
  %810 = vmatpush1.msra.mxu0 0.0
  %811 = vmatprep.subr.mxu0 0.0
  %812 = vmatpush1.msra.mxu0 0.0
  %813 = vmatprep.subr.mxu0 0.0
  %814 = vmatpush1.msra.mxu0 0.0
  %815 = vmatprep.subr.mxu0 0.0
  %816 = vmatpush1.msra.mxu0 0.0
  %817 = vmatprep.subr.mxu0 0.0
  %818 = vmatpush1.msra.mxu0 0.0
  %819 = vmatprep.subr.mxu0 0.0
  %820 = vmatpush1.msra.mxu0 0.0
  %821 = vmatprep.subr.mxu0 0.0
  %822 = vmatpush1.msra.mxu0 0.0
  %823 = vmatprep.subr.mxu0 0.0
  %824 = vmatpush1.msra.mxu0 0.0
  %825 = vmatprep.subr.mxu0 0.0
  %826 = vmatpush1.msra.mxu0 0.0
  %827 = vmatprep.subr.mxu0 0.0
  %v828 = vand.u32 %v486, 4294901760
  %v829 = vsub.f32 %v486, %v828
  %v830 = vand.u32 %v829, 4294901760
  %831 = vmatpush1.msra.mxu0 %v830
  %832 = vmatprep.subr.mxu0 0.0
  %833 = vmatpush2.msra.mxu0 0.0
  %834 = vmatprep.subr.mxu0 0.0
  %835 = vmatpush2.msra.mxu0 0.0
  %836 = vmatprep.subr.mxu0 0.0
  %837 = vmatpush2.msra.mxu0 0.0
  %838 = vmatprep.subr.mxu0 0.0
  %839 = vmatpush2.msra.mxu0 0.0
  %840 = vmatprep.subr.mxu0 0.0
  %841 = vmatpush2.msra.mxu0 0.0
  %842 = vmatprep.subr.mxu0 0.0
  %843 = vmatpush2.msra.mxu0 0.0
  %844 = vmatprep.subr.mxu0 0.0
  %845 = vmatpush2.msra.mxu0 0.0
  %846 = vmatprep.subr.mxu0 0.0
  %847 = vmatpush2.msra.mxu0 0.0
  %848 = vmatprep.subr.mxu0 0.0
  %849 = vmatpush2.msra.mxu0 0.0
  %850 = vmatprep.subr.mxu0 0.0
  %851 = vmatpush2.msra.mxu0 0.0
  %852 = vmatprep.subr.mxu0 0.0
  %853 = vmatpush2.msra.mxu0 0.0
  %854 = vmatprep.subr.mxu0 0.0
  %855 = vmatpush2.msra.mxu0 0.0
  %856 = vmatprep.subr.mxu0 0.0
  %857 = vmatpush2.msra.mxu0 0.0
  %858 = vmatprep.subr.mxu0 0.0
  %859 = vmatpush2.msra.mxu0 0.0
  %860 = vmatprep.subr.mxu0 0.0
  %861 = vmatpush2.msra.mxu0 0.0
  %862 = vmatprep.subr.mxu0 0.0
  %863 = vmatpush2.msra.mxu0 0.0
  %864 = vmatprep.mubr.f32.mxu0 0.0
  %v865 = vand.u32 %v495, 4294901760
  %866 = vmatmul.mubr.f32.gmra.mxu0 %v865
  %v867 = vpop.f32.mrf.mxu0
  %v868 = vadd.f32 %v794, %v867
  %v869 = vpop.f32.mrf.mxu0
  %870 = vdwg.mxu0
  %871 = vmatprep.subr.mxu0 0.0
  %872 = vmatpush1.msra.mxu0 0.0
  %873 = vmatprep.subr.mxu0 0.0
  %874 = vmatpush1.msra.mxu0 0.0
  %875 = vmatprep.subr.mxu0 0.0
  %876 = vmatpush1.msra.mxu0 0.0
  %877 = vmatprep.subr.mxu0 0.0
  %878 = vmatpush1.msra.mxu0 0.0
  %879 = vmatprep.subr.mxu0 0.0
  %880 = vmatpush1.msra.mxu0 0.0
  %881 = vmatprep.subr.mxu0 0.0
  %882 = vmatpush1.msra.mxu0 0.0
  %883 = vmatprep.subr.mxu0 0.0
  %884 = vmatpush1.msra.mxu0 0.0
  %885 = vmatprep.subr.mxu0 0.0
  %886 = vmatpush1.msra.mxu0 0.0
  %887 = vmatprep.subr.mxu0 0.0
  %888 = vmatpush1.msra.mxu0 0.0
  %889 = vmatprep.subr.mxu0 0.0
  %890 = vmatpush1.msra.mxu0 0.0
  %891 = vmatprep.subr.mxu0 0.0
  %892 = vmatpush1.msra.mxu0 0.0
  %893 = vmatprep.subr.mxu0 0.0
  %894 = vmatpush1.msra.mxu0 0.0
  %895 = vmatprep.subr.mxu0 0.0
  %896 = vmatpush1.msra.mxu0 0.0
  %897 = vmatprep.subr.mxu0 0.0
  %898 = vmatpush1.msra.mxu0 0.0
  %899 = vmatprep.subr.mxu0 0.0
  %900 = vmatpush1.msra.mxu0 0.0
  %901 = vmatprep.subr.mxu0 0.0
  %v902 = vand.u32 %v486, 4294901760
  %903 = vmatpush1.msra.mxu0 %v902
  %904 = vmatprep.subr.mxu0 0.0
  %905 = vmatpush2.msra.mxu0 0.0
  %906 = vmatprep.subr.mxu0 0.0
  %907 = vmatpush2.msra.mxu0 0.0
  %908 = vmatprep.subr.mxu0 0.0
  %909 = vmatpush2.msra.mxu0 0.0
  %910 = vmatprep.subr.mxu0 0.0
  %911 = vmatpush2.msra.mxu0 0.0
  %912 = vmatprep.subr.mxu0 0.0
  %913 = vmatpush2.msra.mxu0 0.0
  %914 = vmatprep.subr.mxu0 0.0
  %915 = vmatpush2.msra.mxu0 0.0
  %916 = vmatprep.subr.mxu0 0.0
  %917 = vmatpush2.msra.mxu0 0.0
  %918 = vmatprep.subr.mxu0 0.0
  %919 = vmatpush2.msra.mxu0 0.0
  %920 = vmatprep.subr.mxu0 0.0
  %921 = vmatpush2.msra.mxu0 0.0
  %922 = vmatprep.subr.mxu0 0.0
  %923 = vmatpush2.msra.mxu0 0.0
  %924 = vmatprep.subr.mxu0 0.0
  %925 = vmatpush2.msra.mxu0 0.0
  %926 = vmatprep.subr.mxu0 0.0
  %927 = vmatpush2.msra.mxu0 0.0
  %928 = vmatprep.subr.mxu0 0.0
  %929 = vmatpush2.msra.mxu0 0.0
  %930 = vmatprep.subr.mxu0 0.0
  %931 = vmatpush2.msra.mxu0 0.0
  %932 = vmatprep.subr.mxu0 0.0
  %933 = vmatpush2.msra.mxu0 0.0
  %934 = vmatprep.subr.mxu0 0.0
  %935 = vmatpush2.msra.mxu0 0.0
  %936 = vmatprep.mubr.f32.mxu0 0.0
  %v937 = vand.u32 %v495, 4294901760
  %938 = vmatmul.mubr.f32.gmra.mxu0 %v937
  %v939 = vpop.f32.mrf.mxu0
  %v940 = vadd.f32 %v868, %v939
  %v941 = vpop.f32.mrf.mxu0
  %942 = vdwg.mxu0
  %v943 = vmax.f32 %v940, 0.0
  %v944 = vld [vmem:[%s5] sm:$0xff]
  %v946 = vsel %vm36, %v944, 0
  %948 = vmatprep.subr.mxu0 0.0
  %949 = vmatpush1.msra.mxu0 0.0
  %950 = vmatprep.subr.mxu0 0.0
  %951 = vmatpush1.msra.mxu0 0.0
  %952 = vmatprep.subr.mxu0 0.0
  %953 = vmatpush1.msra.mxu0 0.0
  %954 = vmatprep.subr.mxu0 0.0
  %955 = vmatpush1.msra.mxu0 0.0
  %956 = vmatprep.subr.mxu0 0.0
  %957 = vmatpush1.msra.mxu0 0.0
  %958 = vmatprep.subr.mxu0 0.0
  %959 = vmatpush1.msra.mxu0 0.0
  %960 = vmatprep.subr.mxu0 0.0
  %961 = vmatpush1.msra.mxu0 0.0
  %962 = vmatprep.subr.mxu0 0.0
  %963 = vmatpush1.msra.mxu0 0.0
  %964 = vmatprep.subr.mxu0 0.0
  %965 = vmatpush1.msra.mxu0 0.0
  %966 = vmatprep.subr.mxu0 0.0
  %967 = vmatpush1.msra.mxu0 0.0
  %968 = vmatprep.subr.mxu0 0.0
  %969 = vmatpush1.msra.mxu0 0.0
  %970 = vmatprep.subr.mxu0 0.0
  %971 = vmatpush1.msra.mxu0 0.0
  %972 = vmatprep.subr.mxu0 0.0
  %973 = vmatpush1.msra.mxu0 0.0
  %974 = vmatprep.subr.mxu0 0.0
  %975 = vmatpush1.msra.mxu0 0.0
  %976 = vmatprep.subr.mxu0 0.0
  %977 = vmatpush1.msra.mxu0 0.0
  %978 = vmatprep.subr.mxu0 0.0
  %v979 = vand.u32 %v943, 4294901760
  %980 = vmatpush1.msra.mxu0 %v979
  %981 = vmatprep.subr.mxu0 0.0
  %982 = vmatpush2.msra.mxu0 0.0
  %983 = vmatprep.subr.mxu0 0.0
  %984 = vmatpush2.msra.mxu0 0.0
  %985 = vmatprep.subr.mxu0 0.0
  %986 = vmatpush2.msra.mxu0 0.0
  %987 = vmatprep.subr.mxu0 0.0
  %988 = vmatpush2.msra.mxu0 0.0
  %989 = vmatprep.subr.mxu0 0.0
  %990 = vmatpush2.msra.mxu0 0.0
  %991 = vmatprep.subr.mxu0 0.0
  %992 = vmatpush2.msra.mxu0 0.0
  %993 = vmatprep.subr.mxu0 0.0
  %994 = vmatpush2.msra.mxu0 0.0
  %995 = vmatprep.subr.mxu0 0.0
  %996 = vmatpush2.msra.mxu0 0.0
  %997 = vmatprep.subr.mxu0 0.0
  %998 = vmatpush2.msra.mxu0 0.0
  %999 = vmatprep.subr.mxu0 0.0
  %1000 = vmatpush2.msra.mxu0 0.0
  %1001 = vmatprep.subr.mxu0 0.0
  %1002 = vmatpush2.msra.mxu0 0.0
  %1003 = vmatprep.subr.mxu0 0.0
  %1004 = vmatpush2.msra.mxu0 0.0
  %1005 = vmatprep.subr.mxu0 0.0
  %1006 = vmatpush2.msra.mxu0 0.0
  %1007 = vmatprep.subr.mxu0 0.0
  %1008 = vmatpush2.msra.mxu0 0.0
  %1009 = vmatprep.subr.mxu0 0.0
  %1010 = vmatpush2.msra.mxu0 0.0
  %1011 = vmatprep.subr.mxu0 0.0
  %1012 = vmatpush2.msra.mxu0 0.0
  %1013 = vmatprep.mubr.f32.mxu0 0.0
  %v1014 = vand.u32 %v946, 4294901760
  %v1015 = vsub.f32 %v946, %v1014
  %v1016 = vand.u32 %v1015, 4294901760
  %v1017 = vsub.f32 %v1015, %v1016
  %v1018 = vand.u32 %v1017, 4294901760
  %1019 = vmatmul.mubr.f32.gmra.mxu0 %v1018
  %v1020 = vpop.f32.mrf.mxu0
  %v1021 = vadd.f32 0.0, %v1020
  %v1022 = vpop.f32.mrf.mxu0
  %1023 = vdwg.mxu0
  %1024 = vmatprep.subr.mxu0 0.0
  %1025 = vmatpush1.msra.mxu0 0.0
  %1026 = vmatprep.subr.mxu0 0.0
  %1027 = vmatpush1.msra.mxu0 0.0
  %1028 = vmatprep.subr.mxu0 0.0
  %1029 = vmatpush1.msra.mxu0 0.0
  %1030 = vmatprep.subr.mxu0 0.0
  %1031 = vmatpush1.msra.mxu0 0.0
  %1032 = vmatprep.subr.mxu0 0.0
  %1033 = vmatpush1.msra.mxu0 0.0
  %1034 = vmatprep.subr.mxu0 0.0
  %1035 = vmatpush1.msra.mxu0 0.0
  %1036 = vmatprep.subr.mxu0 0.0
  %1037 = vmatpush1.msra.mxu0 0.0
  %1038 = vmatprep.subr.mxu0 0.0
  %1039 = vmatpush1.msra.mxu0 0.0
  %1040 = vmatprep.subr.mxu0 0.0
  %1041 = vmatpush1.msra.mxu0 0.0
  %1042 = vmatprep.subr.mxu0 0.0
  %1043 = vmatpush1.msra.mxu0 0.0
  %1044 = vmatprep.subr.mxu0 0.0
  %1045 = vmatpush1.msra.mxu0 0.0
  %1046 = vmatprep.subr.mxu0 0.0
  %1047 = vmatpush1.msra.mxu0 0.0
  %1048 = vmatprep.subr.mxu0 0.0
  %1049 = vmatpush1.msra.mxu0 0.0
  %1050 = vmatprep.subr.mxu0 0.0
  %1051 = vmatpush1.msra.mxu0 0.0
  %1052 = vmatprep.subr.mxu0 0.0
  %1053 = vmatpush1.msra.mxu0 0.0
  %1054 = vmatprep.subr.mxu0 0.0
  %v1055 = vand.u32 %v943, 4294901760
  %v1056 = vsub.f32 %v943, %v1055
  %v1057 = vand.u32 %v1056, 4294901760
  %v1058 = vsub.f32 %v1056, %v1057
  %v1059 = vand.u32 %v1058, 4294901760
  %1060 = vmatpush1.msra.mxu0 %v1059
  %1061 = vmatprep.subr.mxu0 0.0
  %1062 = vmatpush2.msra.mxu0 0.0
  %1063 = vmatprep.subr.mxu0 0.0
  %1064 = vmatpush2.msra.mxu0 0.0
  %1065 = vmatprep.subr.mxu0 0.0
  %1066 = vmatpush2.msra.mxu0 0.0
  %1067 = vmatprep.subr.mxu0 0.0
  %1068 = vmatpush2.msra.mxu0 0.0
  %1069 = vmatprep.subr.mxu0 0.0
  %1070 = vmatpush2.msra.mxu0 0.0
  %1071 = vmatprep.subr.mxu0 0.0
  %1072 = vmatpush2.msra.mxu0 0.0
  %1073 = vmatprep.subr.mxu0 0.0
  %1074 = vmatpush2.msra.mxu0 0.0
  %1075 = vmatprep.subr.mxu0 0.0
  %1076 = vmatpush2.msra.mxu0 0.0
  %1077 = vmatprep.subr.mxu0 0.0
  %1078 = vmatpush2.msra.mxu0 0.0
  %1079 = vmatprep.subr.mxu0 0.0
  %1080 = vmatpush2.msra.mxu0 0.0
  %1081 = vmatprep.subr.mxu0 0.0
  %1082 = vmatpush2.msra.mxu0 0.0
  %1083 = vmatprep.subr.mxu0 0.0
  %1084 = vmatpush2.msra.mxu0 0.0
  %1085 = vmatprep.subr.mxu0 0.0
  %1086 = vmatpush2.msra.mxu0 0.0
  %1087 = vmatprep.subr.mxu0 0.0
  %1088 = vmatpush2.msra.mxu0 0.0
  %1089 = vmatprep.subr.mxu0 0.0
  %1090 = vmatpush2.msra.mxu0 0.0
  %1091 = vmatprep.subr.mxu0 0.0
  %1092 = vmatpush2.msra.mxu0 0.0
  %1093 = vmatprep.mubr.f32.mxu0 0.0
  %v1094 = vand.u32 %v946, 4294901760
  %1095 = vmatmul.mubr.f32.gmra.mxu0 %v1094
  %v1096 = vpop.f32.mrf.mxu0
  %v1097 = vadd.f32 %v1021, %v1096
  %v1098 = vpop.f32.mrf.mxu0
  %1099 = vdwg.mxu0
  %1100 = vmatprep.subr.mxu0 0.0
  %1101 = vmatpush1.msra.mxu0 0.0
  %1102 = vmatprep.subr.mxu0 0.0
  %1103 = vmatpush1.msra.mxu0 0.0
  %1104 = vmatprep.subr.mxu0 0.0
  %1105 = vmatpush1.msra.mxu0 0.0
  %1106 = vmatprep.subr.mxu0 0.0
  %1107 = vmatpush1.msra.mxu0 0.0
  %1108 = vmatprep.subr.mxu0 0.0
  %1109 = vmatpush1.msra.mxu0 0.0
  %1110 = vmatprep.subr.mxu0 0.0
  %1111 = vmatpush1.msra.mxu0 0.0
  %1112 = vmatprep.subr.mxu0 0.0
  %1113 = vmatpush1.msra.mxu0 0.0
  %1114 = vmatprep.subr.mxu0 0.0
  %1115 = vmatpush1.msra.mxu0 0.0
  %1116 = vmatprep.subr.mxu0 0.0
  %1117 = vmatpush1.msra.mxu0 0.0
  %1118 = vmatprep.subr.mxu0 0.0
  %1119 = vmatpush1.msra.mxu0 0.0
  %1120 = vmatprep.subr.mxu0 0.0
  %1121 = vmatpush1.msra.mxu0 0.0
  %1122 = vmatprep.subr.mxu0 0.0
  %1123 = vmatpush1.msra.mxu0 0.0
  %1124 = vmatprep.subr.mxu0 0.0
  %1125 = vmatpush1.msra.mxu0 0.0
  %1126 = vmatprep.subr.mxu0 0.0
  %1127 = vmatpush1.msra.mxu0 0.0
  %1128 = vmatprep.subr.mxu0 0.0
  %1129 = vmatpush1.msra.mxu0 0.0
  %1130 = vmatprep.subr.mxu0 0.0
  %v1131 = vand.u32 %v943, 4294901760
  %v1132 = vsub.f32 %v943, %v1131
  %1133 = vmatpush1.msra.mxu0 %v1132
  %1134 = vmatprep.subr.mxu0 0.0
  %1135 = vmatpush2.msra.mxu0 0.0
  %1136 = vmatprep.subr.mxu0 0.0
  %1137 = vmatpush2.msra.mxu0 0.0
  %1138 = vmatprep.subr.mxu0 0.0
  %1139 = vmatpush2.msra.mxu0 0.0
  %1140 = vmatprep.subr.mxu0 0.0
  %1141 = vmatpush2.msra.mxu0 0.0
  %1142 = vmatprep.subr.mxu0 0.0
  %1143 = vmatpush2.msra.mxu0 0.0
  %1144 = vmatprep.subr.mxu0 0.0
  %1145 = vmatpush2.msra.mxu0 0.0
  %1146 = vmatprep.subr.mxu0 0.0
  %1147 = vmatpush2.msra.mxu0 0.0
  %1148 = vmatprep.subr.mxu0 0.0
  %1149 = vmatpush2.msra.mxu0 0.0
  %1150 = vmatprep.subr.mxu0 0.0
  %1151 = vmatpush2.msra.mxu0 0.0
  %1152 = vmatprep.subr.mxu0 0.0
  %1153 = vmatpush2.msra.mxu0 0.0
  %1154 = vmatprep.subr.mxu0 0.0
  %1155 = vmatpush2.msra.mxu0 0.0
  %1156 = vmatprep.subr.mxu0 0.0
  %1157 = vmatpush2.msra.mxu0 0.0
  %1158 = vmatprep.subr.mxu0 0.0
  %1159 = vmatpush2.msra.mxu0 0.0
  %1160 = vmatprep.subr.mxu0 0.0
  %1161 = vmatpush2.msra.mxu0 0.0
  %1162 = vmatprep.subr.mxu0 0.0
  %1163 = vmatpush2.msra.mxu0 0.0
  %1164 = vmatprep.subr.mxu0 0.0
  %1165 = vmatpush2.msra.mxu0 0.0
  %1166 = vmatprep.mubr.f32.mxu0 0.0
  %v1167 = vand.u32 %v946, 4294901760
  %v1168 = vsub.f32 %v946, %v1167
  %1169 = vmatmul.mubr.f32.gmra.mxu0 %v1168
  %v1170 = vpop.f32.mrf.mxu0
  %v1171 = vadd.f32 %v1097, %v1170
  %v1172 = vpop.f32.mrf.mxu0
  %1173 = vdwg.mxu0
  %1174 = vmatprep.subr.mxu0 0.0
  %1175 = vmatpush1.msra.mxu0 0.0
  %1176 = vmatprep.subr.mxu0 0.0
  %1177 = vmatpush1.msra.mxu0 0.0
  %1178 = vmatprep.subr.mxu0 0.0
  %1179 = vmatpush1.msra.mxu0 0.0
  %1180 = vmatprep.subr.mxu0 0.0
  %1181 = vmatpush1.msra.mxu0 0.0
  %1182 = vmatprep.subr.mxu0 0.0
  %1183 = vmatpush1.msra.mxu0 0.0
  %1184 = vmatprep.subr.mxu0 0.0
  %1185 = vmatpush1.msra.mxu0 0.0
  %1186 = vmatprep.subr.mxu0 0.0
  %1187 = vmatpush1.msra.mxu0 0.0
  %1188 = vmatprep.subr.mxu0 0.0
  %1189 = vmatpush1.msra.mxu0 0.0
  %1190 = vmatprep.subr.mxu0 0.0
  %1191 = vmatpush1.msra.mxu0 0.0
  %1192 = vmatprep.subr.mxu0 0.0
  %1193 = vmatpush1.msra.mxu0 0.0
  %1194 = vmatprep.subr.mxu0 0.0
  %1195 = vmatpush1.msra.mxu0 0.0
  %1196 = vmatprep.subr.mxu0 0.0
  %1197 = vmatpush1.msra.mxu0 0.0
  %1198 = vmatprep.subr.mxu0 0.0
  %1199 = vmatpush1.msra.mxu0 0.0
  %1200 = vmatprep.subr.mxu0 0.0
  %1201 = vmatpush1.msra.mxu0 0.0
  %1202 = vmatprep.subr.mxu0 0.0
  %1203 = vmatpush1.msra.mxu0 0.0
  %1204 = vmatprep.subr.mxu0 0.0
  %v1205 = vand.u32 %v943, 4294901760
  %1206 = vmatpush1.msra.mxu0 %v1205
  %1207 = vmatprep.subr.mxu0 0.0
  %1208 = vmatpush2.msra.mxu0 0.0
  %1209 = vmatprep.subr.mxu0 0.0
  %1210 = vmatpush2.msra.mxu0 0.0
  %1211 = vmatprep.subr.mxu0 0.0
  %1212 = vmatpush2.msra.mxu0 0.0
  %1213 = vmatprep.subr.mxu0 0.0
  %1214 = vmatpush2.msra.mxu0 0.0
  %1215 = vmatprep.subr.mxu0 0.0
  %1216 = vmatpush2.msra.mxu0 0.0
  %1217 = vmatprep.subr.mxu0 0.0
  %1218 = vmatpush2.msra.mxu0 0.0
  %1219 = vmatprep.subr.mxu0 0.0
  %1220 = vmatpush2.msra.mxu0 0.0
  %1221 = vmatprep.subr.mxu0 0.0
  %1222 = vmatpush2.msra.mxu0 0.0
  %1223 = vmatprep.subr.mxu0 0.0
  %1224 = vmatpush2.msra.mxu0 0.0
  %1225 = vmatprep.subr.mxu0 0.0
  %1226 = vmatpush2.msra.mxu0 0.0
  %1227 = vmatprep.subr.mxu0 0.0
  %1228 = vmatpush2.msra.mxu0 0.0
  %1229 = vmatprep.subr.mxu0 0.0
  %1230 = vmatpush2.msra.mxu0 0.0
  %1231 = vmatprep.subr.mxu0 0.0
  %1232 = vmatpush2.msra.mxu0 0.0
  %1233 = vmatprep.subr.mxu0 0.0
  %1234 = vmatpush2.msra.mxu0 0.0
  %1235 = vmatprep.subr.mxu0 0.0
  %1236 = vmatpush2.msra.mxu0 0.0
  %1237 = vmatprep.subr.mxu0 0.0
  %1238 = vmatpush2.msra.mxu0 0.0
  %1239 = vmatprep.mubr.f32.mxu0 0.0
  %v1240 = vand.u32 %v946, 4294901760
  %v1241 = vsub.f32 %v946, %v1240
  %v1242 = vand.u32 %v1241, 4294901760
  %1243 = vmatmul.mubr.f32.gmra.mxu0 %v1242
  %v1244 = vpop.f32.mrf.mxu0
  %v1245 = vadd.f32 %v1171, %v1244
  %v1246 = vpop.f32.mrf.mxu0
  %1247 = vdwg.mxu0
  %1248 = vmatprep.subr.mxu0 0.0
  %1249 = vmatpush1.msra.mxu0 0.0
  %1250 = vmatprep.subr.mxu0 0.0
  %1251 = vmatpush1.msra.mxu0 0.0
  %1252 = vmatprep.subr.mxu0 0.0
  %1253 = vmatpush1.msra.mxu0 0.0
  %1254 = vmatprep.subr.mxu0 0.0
  %1255 = vmatpush1.msra.mxu0 0.0
  %1256 = vmatprep.subr.mxu0 0.0
  %1257 = vmatpush1.msra.mxu0 0.0
  %1258 = vmatprep.subr.mxu0 0.0
  %1259 = vmatpush1.msra.mxu0 0.0
  %1260 = vmatprep.subr.mxu0 0.0
  %1261 = vmatpush1.msra.mxu0 0.0
  %1262 = vmatprep.subr.mxu0 0.0
  %1263 = vmatpush1.msra.mxu0 0.0
  %1264 = vmatprep.subr.mxu0 0.0
  %1265 = vmatpush1.msra.mxu0 0.0
  %1266 = vmatprep.subr.mxu0 0.0
  %1267 = vmatpush1.msra.mxu0 0.0
  %1268 = vmatprep.subr.mxu0 0.0
  %1269 = vmatpush1.msra.mxu0 0.0
  %1270 = vmatprep.subr.mxu0 0.0
  %1271 = vmatpush1.msra.mxu0 0.0
  %1272 = vmatprep.subr.mxu0 0.0
  %1273 = vmatpush1.msra.mxu0 0.0
  %1274 = vmatprep.subr.mxu0 0.0
  %1275 = vmatpush1.msra.mxu0 0.0
  %1276 = vmatprep.subr.mxu0 0.0
  %1277 = vmatpush1.msra.mxu0 0.0
  %1278 = vmatprep.subr.mxu0 0.0
  %v1279 = vand.u32 %v943, 4294901760
  %v1280 = vsub.f32 %v943, %v1279
  %v1281 = vand.u32 %v1280, 4294901760
  %1282 = vmatpush1.msra.mxu0 %v1281
  %1283 = vmatprep.subr.mxu0 0.0
  %1284 = vmatpush2.msra.mxu0 0.0
  %1285 = vmatprep.subr.mxu0 0.0
  %1286 = vmatpush2.msra.mxu0 0.0
  %1287 = vmatprep.subr.mxu0 0.0
  %1288 = vmatpush2.msra.mxu0 0.0
  %1289 = vmatprep.subr.mxu0 0.0
  %1290 = vmatpush2.msra.mxu0 0.0
  %1291 = vmatprep.subr.mxu0 0.0
  %1292 = vmatpush2.msra.mxu0 0.0
  %1293 = vmatprep.subr.mxu0 0.0
  %1294 = vmatpush2.msra.mxu0 0.0
  %1295 = vmatprep.subr.mxu0 0.0
  %1296 = vmatpush2.msra.mxu0 0.0
  %1297 = vmatprep.subr.mxu0 0.0
  %1298 = vmatpush2.msra.mxu0 0.0
  %1299 = vmatprep.subr.mxu0 0.0
  %1300 = vmatpush2.msra.mxu0 0.0
  %1301 = vmatprep.subr.mxu0 0.0
  %1302 = vmatpush2.msra.mxu0 0.0
  %1303 = vmatprep.subr.mxu0 0.0
  %1304 = vmatpush2.msra.mxu0 0.0
  %1305 = vmatprep.subr.mxu0 0.0
  %1306 = vmatpush2.msra.mxu0 0.0
  %1307 = vmatprep.subr.mxu0 0.0
  %1308 = vmatpush2.msra.mxu0 0.0
  %1309 = vmatprep.subr.mxu0 0.0
  %1310 = vmatpush2.msra.mxu0 0.0
  %1311 = vmatprep.subr.mxu0 0.0
  %1312 = vmatpush2.msra.mxu0 0.0
  %1313 = vmatprep.subr.mxu0 0.0
  %1314 = vmatpush2.msra.mxu0 0.0
  %1315 = vmatprep.mubr.f32.mxu0 0.0
  %v1316 = vand.u32 %v946, 4294901760
  %1317 = vmatmul.mubr.f32.gmra.mxu0 %v1316
  %v1318 = vpop.f32.mrf.mxu0
  %v1319 = vadd.f32 %v1245, %v1318
  %v1320 = vpop.f32.mrf.mxu0
  %1321 = vdwg.mxu0
  %1322 = vmatprep.subr.mxu0 0.0
  %1323 = vmatpush1.msra.mxu0 0.0
  %1324 = vmatprep.subr.mxu0 0.0
  %1325 = vmatpush1.msra.mxu0 0.0
  %1326 = vmatprep.subr.mxu0 0.0
  %1327 = vmatpush1.msra.mxu0 0.0
  %1328 = vmatprep.subr.mxu0 0.0
  %1329 = vmatpush1.msra.mxu0 0.0
  %1330 = vmatprep.subr.mxu0 0.0
  %1331 = vmatpush1.msra.mxu0 0.0
  %1332 = vmatprep.subr.mxu0 0.0
  %1333 = vmatpush1.msra.mxu0 0.0
  %1334 = vmatprep.subr.mxu0 0.0
  %1335 = vmatpush1.msra.mxu0 0.0
  %1336 = vmatprep.subr.mxu0 0.0
  %1337 = vmatpush1.msra.mxu0 0.0
  %1338 = vmatprep.subr.mxu0 0.0
  %1339 = vmatpush1.msra.mxu0 0.0
  %1340 = vmatprep.subr.mxu0 0.0
  %1341 = vmatpush1.msra.mxu0 0.0
  %1342 = vmatprep.subr.mxu0 0.0
  %1343 = vmatpush1.msra.mxu0 0.0
  %1344 = vmatprep.subr.mxu0 0.0
  %1345 = vmatpush1.msra.mxu0 0.0
  %1346 = vmatprep.subr.mxu0 0.0
  %1347 = vmatpush1.msra.mxu0 0.0
  %1348 = vmatprep.subr.mxu0 0.0
  %1349 = vmatpush1.msra.mxu0 0.0
  %1350 = vmatprep.subr.mxu0 0.0
  %1351 = vmatpush1.msra.mxu0 0.0
  %1352 = vmatprep.subr.mxu0 0.0
  %v1353 = vand.u32 %v943, 4294901760
  %1354 = vmatpush1.msra.mxu0 %v1353
  %1355 = vmatprep.subr.mxu0 0.0
  %1356 = vmatpush2.msra.mxu0 0.0
  %1357 = vmatprep.subr.mxu0 0.0
  %1358 = vmatpush2.msra.mxu0 0.0
  %1359 = vmatprep.subr.mxu0 0.0
  %1360 = vmatpush2.msra.mxu0 0.0
  %1361 = vmatprep.subr.mxu0 0.0
  %1362 = vmatpush2.msra.mxu0 0.0
  %1363 = vmatprep.subr.mxu0 0.0
  %1364 = vmatpush2.msra.mxu0 0.0
  %1365 = vmatprep.subr.mxu0 0.0
  %1366 = vmatpush2.msra.mxu0 0.0
  %1367 = vmatprep.subr.mxu0 0.0
  %1368 = vmatpush2.msra.mxu0 0.0
  %1369 = vmatprep.subr.mxu0 0.0
  %1370 = vmatpush2.msra.mxu0 0.0
  %1371 = vmatprep.subr.mxu0 0.0
  %1372 = vmatpush2.msra.mxu0 0.0
  %1373 = vmatprep.subr.mxu0 0.0
  %1374 = vmatpush2.msra.mxu0 0.0
  %1375 = vmatprep.subr.mxu0 0.0
  %1376 = vmatpush2.msra.mxu0 0.0
  %1377 = vmatprep.subr.mxu0 0.0
  %1378 = vmatpush2.msra.mxu0 0.0
  %1379 = vmatprep.subr.mxu0 0.0
  %1380 = vmatpush2.msra.mxu0 0.0
  %1381 = vmatprep.subr.mxu0 0.0
  %1382 = vmatpush2.msra.mxu0 0.0
  %1383 = vmatprep.subr.mxu0 0.0
  %1384 = vmatpush2.msra.mxu0 0.0
  %1385 = vmatprep.subr.mxu0 0.0
  %1386 = vmatpush2.msra.mxu0 0.0
  %1387 = vmatprep.mubr.f32.mxu0 0.0
  %v1388 = vand.u32 %v946, 4294901760
  %1389 = vmatmul.mubr.f32.gmra.mxu0 %v1388
  %v1390 = vpop.f32.mrf.mxu0
  %v1391 = vadd.f32 %v1319, %v1390
  %v1392 = vpop.f32.mrf.mxu0
  %1393 = vdwg.mxu0
  %v1394 = vld [vmem:[#allocation2] sm:$0x1]
  %1396 = vset.pattern.permute.xlu0 0
  %1397 = vperm.xlu0 %1396, %v1394
  %v1398 = vpop.permute.xlu0 %1397
  %v1400 = vlaneseq
  %v1401 = vshrl.u32 %v1400, 7
  %v1402 = vsub.s32 0, %v1401
  %v1403 = vrot.slane %v1398, %v1402
  %v1404 = vadd.f32 %v1391, %v1403
  %1405 = vst [vmem:[%s7] sm:$0x1] %v1404
  // Predicated region
  $region30: #{predict_crowdfund_v2.1} parent=0 // pred_check
    _
  $region31: #{predict_crowdfund_v2.1} parent=0 // pred_check_branch
    %1407 = sbr.rel (0) target = $region33
  $region32: #{predict_crowdfund_v2.1} parent=0 // pred_region
    _
  $region33: #{predict_crowdfund_v2.1} parent=0 // pred_fallthru
    _
  // Predicated region
  $region34: #{predict_crowdfund_v2.1} parent=0 // pred_check
    _
  $region35: #{predict_crowdfund_v2.1} parent=0 // pred_check_branch
    %1409 = sbr.rel (0) target = $region37
  $region36: #{predict_crowdfund_v2.1} parent=0 // pred_region
    _
  $region37: #{predict_crowdfund_v2.1} parent=0 // pred_fallthru
    _

</llo_original>
